<compile_context>
chip_gen: v7x
topology: tpu7x:2x2x1
jax: 0.10.0
libtpu: 0.0.40
codegen_flags: <defaults>
</compile_context>

<pallas_src>
import jax
import jax.numpy as jnp
from jax.experimental import pallas as pl
from jax.experimental.pallas import tpu as pltpu


def _cross_stitch_kernel(t_ref, x1_ref, x2_ref, o1_ref, o2_ref):
    # t_ref: (2, 2) f32 scalars in SMEM; x*/o* refs: (tile_rows, width) VMEM.
    a = t_ref[0, 0]
    b = t_ref[0, 1]
    c = t_ref[1, 0]
    d = t_ref[1, 1]
    x1 = x1_ref[...]
    x2 = x2_ref[...]
    # Arithmetic promotes to f32 for sub-32-bit inputs; cast back on store.
    o1_ref[...] = (a * x1 + b * x2).astype(o1_ref.dtype)
    o2_ref[...] = (c * x1 + d * x2).astype(o2_ref.dtype)


def cross_stitch(transform, input_1, input_2, *, donate_inputs=False):
    """Pallas implementation of CrossStich.forward.

    transform: (2, 2) array (used as float32 scalars for the mixing).
    input_1, input_2: same arbitrary shape (e.g. NCHW), same dtype.
    donate_inputs: if True, alias the two input slabs onto the two outputs
      (only for callers that will not reuse the inputs afterwards).
    Returns (out1, out2) with the same shape/dtype as the inputs.
    """
    assert input_1.shape == input_2.shape
    assert input_1.dtype == input_2.dtype
    orig_shape = input_1.shape
    dtype = input_1.dtype
    itemsize = jnp.dtype(dtype).itemsize
    total = input_1.size

    # Sublane packing multiple for this dtype: 8 (f32), 16 (bf16), 32 (int8).
    sub = max(8, 32 // itemsize)

    # Lane-dense slab width: widest multiple of 128 that divides the element
    # count exactly *and* keeps rows >= the sublane multiple (dense vregs).
    # Relax the depth requirement next; pad a <128-element tail only if
    # nothing divides at all.
    width = 0
    for cand in (4096, 2048, 1024, 512, 256, 128):
        if total % cand == 0 and total // cand >= sub:
            width = cand
            break
    if width == 0:
        for cand in (4096, 2048, 1024, 512, 256, 128):
            if total % cand == 0:
                width = cand
                break
    if width == 0:
        width = 128  # TODO(synk): ragged tail; pads < 128 elements of the flat vector.

    pad_amt = (-total) % width
    rows = (total + pad_amt) // width

    # Tile sizing: ~4 MiB per input tile amortizes the ~0.35 us/step overhead
    # against v6e/v7x HBM speeds (harmless on v5e), but keep >= ~4 grid steps
    # when the slab is deep enough so DMAs pipeline and v7x can split the
    # single parallel axis across its two TensorCores.  No row padding: the
    # last row-block may be partial and Pallas masks its writes.
    if rows <= sub:
        tile_rows = rows  # full-extent block on dim 0 (always legal)
    else:
        target_tile_bytes = 4 << 20
        max_tr = max(sub, ((target_tile_bytes // itemsize) // width) // sub * sub)
        want_tr = max(sub, ((pl.cdiv(rows, 4) + sub - 1) // sub) * sub)
        tile_rows = min(max_tr, want_tr)
    grid = (pl.cdiv(rows, tile_rows),)

    def to_slab(x):
        flat = x.reshape(-1)
        if pad_amt:
            flat = jnp.pad(flat, (0, pad_amt))
        return flat.reshape(rows, width)

    x1 = to_slab(input_1)
    x2 = to_slab(input_2)
    t = transform.astype(jnp.float32)

    tile_spec = pl.BlockSpec((tile_rows, width), lambda i: (i, 0))
    out_shape = jax.ShapeDtypeStruct((rows, width), dtype)

    # Purely mem-bound: 2 inputs read + 2 outputs written, ~6 flops/elem.
    cost = pl.CostEstimate(
        flops=6 * total,
        transcendentals=0,
        bytes_accessed=4 * total * itemsize,
    )

    o1, o2 = pl.pallas_call(
        _cross_stitch_kernel,
        grid=grid,
        in_specs=[
            pl.BlockSpec(memory_space=pltpu.SMEM),  # 2x2 transform, scalar reads
            tile_spec,
            tile_spec,
        ],
        out_specs=(tile_spec, tile_spec),
        out_shape=(out_shape, out_shape),
        compiler_params=pltpu.CompilerParams(
            # Single grid axis is fully parallel: lets v7x shard it across its
            # 2 TensorCores; a no-op on v5e/v6e.
            dimension_semantics=(pltpu.PARALLEL,),
            # 2 in + 2 out, double-buffered, <=4 MiB tiles -> <=32 MiB + headroom;
            # below v7x's 64 MiB/TC physical VMEM, above every scoped default.
            vmem_limit_bytes=48 * 1024 * 1024,
        ),
        cost_estimate=cost,
        input_output_aliases={1: 0, 2: 1} if donate_inputs else {},
    )(t, x1, x2)

    def from_slab(y):
        flat = y.reshape(-1)
        if pad_amt:
            flat = flat[:total]
        return flat.reshape(orig_shape)

    return from_slab(o1), from_slab(o2)


def cross_stitch_ref(transform, input_1, input_2):
    """Pure-JAX reference mirroring the PyTorch forward."""
    return (
        transform[0, 0] * input_1 + transform[0, 1] * input_2,
        transform[1, 0] * input_1 + transform[1, 1] * input_2,
    )


if __name__ == "__main__":
    key = jax.random.PRNGKey(0)
    k1, k2, k3, k4 = jax.random.split(key, 4)

    # Deterministic parameter init: identity (like the module) plus a small
    # off-diagonal mixing term so both terms of the stitch are exercised.
    transform = jnp.array([[1.0, 0.25],
                           [0.10, 1.0]], dtype=jnp.float32)

    # 1) NCHW inputs, as the PyTorch module would see from a conv stack
    #    (aligned path: no padding, single clean slab).
    shape = (2, 4, 16, 16)
    x1 = jax.random.normal(k1, shape, dtype=jnp.float32)
    x2 = jax.random.normal(k2, shape, dtype=jnp.float32)

    out1, out2 = cross_stitch(transform, x1, x2)
    out1 = jax.block_until_ready(out1)
    out2 = jax.block_until_ready(out2)

    ref1, ref2 = cross_stitch_ref(transform, x1, x2)
    assert out1.shape == shape and out2.shape == shape
    assert jnp.allclose(out1, ref1, atol=1e-6, rtol=1e-6)
    assert jnp.allclose(out2, ref2, atol=1e-6, rtol=1e-6)

    # 2) Ragged shape: exercises the small tail pad *and* the partial last
    #    row-block (masked writes) path.
    shape_r = (3, 5, 17, 23)
    y1 = jax.random.normal(k3, shape_r, dtype=jnp.float32)
    y2 = jax.random.normal(k4, shape_r, dtype=jnp.float32)

    ro1, ro2 = cross_stitch(transform, y1, y2)
    ro1 = jax.block_until_ready(ro1)
    ro2 = jax.block_until_ready(ro2)

    rr1, rr2 = cross_stitch_ref(transform, y1, y2)
    assert ro1.shape == shape_r and ro2.shape == shape_r
    assert jnp.allclose(ro1, rr1, atol=1e-6, rtol=1e-6)
    assert jnp.allclose(ro2, rr2, atol=1e-6, rtol=1e-6)

    print("KERNEL_OK")
</pallas_src>

<mosaic_0001>
module attributes {stable_mosaic.version = 11 : i64} {
  func.func @_cross_stitch_kernel(%arg0: i32, %arg1: memref<2x2xf32, #tpu.memory_space<smem>>, %arg2: memref<8x256xf32, #tpu.memory_space<vmem>>, %arg3: memref<8x256xf32, #tpu.memory_space<vmem>>, %arg4: memref<8x256xf32, #tpu.memory_space<vmem>>, %arg5: memref<8x256xf32, #tpu.memory_space<vmem>>) attributes {dimension_semantics = [#tpu.dimension_semantics<parallel>], iteration_bounds = array<i64: 1>, scalar_prefetch = 0 : i64, scratch_operands = 0 : i64, tpu.core_type = #tpu.core_type<tc>, window_params = [{transform_indices = @transform_0, window_bounds = array<i64: 2, 2>}, {transform_indices = @transform_1, window_bounds = array<i64: 8, 256>}, {transform_indices = @transform_2, window_bounds = array<i64: 8, 256>}, {transform_indices = @transform_3, window_bounds = array<i64: 8, 256>}, {transform_indices = @transform_4, window_bounds = array<i64: 8, 256>}]} {
    %c0 = arith.constant 0 : index
    %c0_0 = arith.constant 0 : index
    %0 = memref.load %arg1[%c0, %c0_0] : memref<2x2xf32, #tpu.memory_space<smem>>
    %c0_1 = arith.constant 0 : index
    %c1 = arith.constant 1 : index
    %1 = memref.load %arg1[%c0_1, %c1] : memref<2x2xf32, #tpu.memory_space<smem>>
    %c1_2 = arith.constant 1 : index
    %c0_3 = arith.constant 0 : index
    %2 = memref.load %arg1[%c1_2, %c0_3] : memref<2x2xf32, #tpu.memory_space<smem>>
    %c1_4 = arith.constant 1 : index
    %c1_5 = arith.constant 1 : index
    %3 = memref.load %arg1[%c1_4, %c1_5] : memref<2x2xf32, #tpu.memory_space<smem>>
    %c0_6 = arith.constant 0 : index
    %c0_7 = arith.constant 0 : index
    %4 = vector.load %arg2[%c0_6, %c0_7] : memref<8x256xf32, #tpu.memory_space<vmem>>, vector<8x256xf32>
    %c0_8 = arith.constant 0 : index
    %c0_9 = arith.constant 0 : index
    %5 = vector.load %arg3[%c0_8, %c0_9] : memref<8x256xf32, #tpu.memory_space<vmem>>, vector<8x256xf32>
    %6 = vector.broadcast %0 : f32 to vector<8x256xf32>
    %7 = arith.mulf %6, %4 : vector<8x256xf32>
    %8 = vector.broadcast %1 : f32 to vector<8x256xf32>
    %9 = arith.mulf %8, %5 : vector<8x256xf32>
    %10 = arith.addf %7, %9 : vector<8x256xf32>
    %c0_10 = arith.constant 0 : index
    %c0_11 = arith.constant 0 : index
    %11 = vector.load %arg4[%c0_10, %c0_11] : memref<8x256xf32, #tpu.memory_space<vmem>>, vector<8x256xf32>
    tpu.vector_store %arg4[%c0_10, %c0_11], %10 {strides = array<i32>} : memref<8x256xf32, #tpu.memory_space<vmem>>, vector<8x256xf32>,
    %12 = vector.broadcast %2 : f32 to vector<8x256xf32>
    %13 = arith.mulf %12, %4 : vector<8x256xf32>
    %14 = vector.broadcast %3 : f32 to vector<8x256xf32>
    %15 = arith.mulf %14, %5 : vector<8x256xf32>
    %16 = arith.addf %13, %15 : vector<8x256xf32>
    %c0_12 = arith.constant 0 : index
    %c0_13 = arith.constant 0 : index
    %17 = vector.load %arg5[%c0_12, %c0_13] : memref<8x256xf32, #tpu.memory_space<vmem>>, vector<8x256xf32>
    tpu.vector_store %arg5[%c0_12, %c0_13], %16 {strides = array<i32>} : memref<8x256xf32, #tpu.memory_space<vmem>>, vector<8x256xf32>,
    return
  }
  func.func @transform_0(%arg0: i32) -> (i32, i32) {
    %c0_i32 = arith.constant 0 : i32
    %c0_i32_0 = arith.constant 0 : i32
    %c0_i32_1 = arith.constant 0 : i32
    return %c0_i32, %c0_i32_0 : i32, i32
  }
  func.func @transform_1(%arg0: i32) -> (i32, i32) {
    %c0_i32 = arith.constant 0 : i32
    %c0_i32_0 = arith.constant 0 : i32
    return %arg0, %c0_i32 : i32, i32
  }
  func.func @transform_2(%arg0: i32) -> (i32, i32) {
    %c0_i32 = arith.constant 0 : i32
    %c0_i32_0 = arith.constant 0 : i32
    return %arg0, %c0_i32 : i32, i32
  }
  func.func @transform_3(%arg0: i32) -> (i32, i32) {
    %c0_i32 = arith.constant 0 : i32
    %c0_i32_0 = arith.constant 0 : i32
    return %arg0, %c0_i32 : i32, i32
  }
  func.func @transform_4(%arg0: i32) -> (i32, i32) {
    %c0_i32 = arith.constant 0 : i32
    %c0_i32_0 = arith.constant 0 : i32
    return %arg0, %c0_i32 : i32, i32
  }
}

</mosaic_0001>

<llo_original>
// kernel: tpu_custom_call.1
$region0: #{tpu_custom_call.1}
  #allocation0 [shape = 'u32[]', space=smem, size = 0x4, offset = 0x4, fixed_abs, tag = 'smem constant byte address 0x4 - core index']
  #allocation1 [shape = 'u32[144,128]{1,0:T(1,128)}', space=vmem, size = 0x12000, scoped, tag = 'internal scratch']
  %s0 = inlined_call_operand.hbm [shape: f32[2,2], index: 0, kind: input, shape index: {}]
  %s1 = inlined_call_operand.hbm [shape: f32[8,256], index: 1, kind: input, shape index: {}]
  %s2 = inlined_call_operand.hbm [shape: f32[8,256], index: 2, kind: input, shape index: {}]
  %s3 = inlined_call_operand.hbm [shape: f32[8,256], index: 3, kind: output, shape index: {0}]
  %s4 = inlined_call_operand.hbm [shape: f32[8,256], index: 4, kind: output, shape index: {1}]
  %5 = xla_tuple %s3, %s4
  %s6 = sld [smem:[#allocation0]]
  $region42: #{tpu_custom_call.1} parent=0
    _
  %s8 = ssub.s32 1, %s6
  %s9 = scalar_select 0, %s8, %s6
  $region1: #{tpu_custom_call.1} parent=0
    #allocation2 [shape = 'u8[1024]{0}', space=smem, size = 0x400, scoped, tag = 'input window, operand 0, single buffered']
    #allocation3 [shape = 's32[1]{0}', space=sflag, size = 0x4, scoped, tag = 'scoped memory for tpu_custom_call.1']
    #allocation4 [shape = 's32[1]{0}', space=sflag, size = 0x4, scoped, tag = 'scoped memory for tpu_custom_call.1']
    #allocation5 [shape = 's32[1]{0}', space=sflag, size = 0x4, scoped, tag = 'scoped memory for tpu_custom_call.1']
    #allocation6 [shape = 'u8[8192]{0}', space=vmem, size = 0x2000, scoped, tag = 'input window, operand 1, single buffered']
    #allocation7 [shape = 'u8[8192]{0}', space=vmem, size = 0x2000, scoped, tag = 'input window, operand 2, single buffered']
    #allocation8 [shape = 's32[1]{0}', space=sflag, size = 0x4, scoped, tag = 'scoped memory for tpu_custom_call.1']
    #allocation9 [shape = 'u8[8192]{0}', space=vmem, size = 0x2000, scoped, tag = 'output window, operand 0, single buffered']
    #allocation10 [shape = 'u8[8192]{0}', space=vmem, size = 0x2000, scoped, tag = 'output window, operand 1, single buffered']
    #allocation11 [shape = 's32[1]{0}', space=sflag, size = 0x4, scoped, tag = 'scoped memory for tpu_custom_call.1']
    %10 = vsyncpa [#allocation5], 0
    %11 = vsyncpa [#allocation3], 0
    %12 = vsyncpa [#allocation8], 0
    %13 = vsyncpa [#allocation4], 0
    %14 = vsyncpa [#allocation11], 0
    // Predicated region
    $region2: #{tpu_custom_call.1} parent=1 // pred_check
      _
    $region3: #{tpu_custom_call.1} parent=1 // pred_check_branch
      %16 = sbr.rel (0) target = $region5
    $region4: #{tpu_custom_call.1} parent=1 // pred_region
      %s18 = ssub.s32 32, 32
      %19 = vsyncadd [#allocation5], %s18
      %22 = dma.hbm_to_smem %s0, 32, [#allocation2], [#allocation5]
    $region5: #{tpu_custom_call.1} parent=1 // pred_fallthru
      _
    // Predicated region
    $region6: #{tpu_custom_call.1} parent=1 // pred_check
      _
    $region7: #{tpu_custom_call.1} parent=1 // pred_check_branch
      %24 = sbr.rel (0) target = $region9
    $region8: #{tpu_custom_call.1} parent=1 // pred_region
      %s26 = ssub.s32 256, 256
      %27 = vsyncadd [#allocation3], %s26
      %s29 = sshll.u32 [#allocation6], 4
      %s30 = int_to_ptr.vmem [resolvable:$true] %s29
      %32 = dma.hbm_to_vmem [thread:$0]  %s1, 256, %s30, [#allocation3]
    $region9: #{tpu_custom_call.1} parent=1 // pred_fallthru
      _
    // Predicated region
    $region10: #{tpu_custom_call.1} parent=1 // pred_check
      _
    $region11: #{tpu_custom_call.1} parent=1 // pred_check_branch
      %34 = sbr.rel (0) target = $region13
    $region12: #{tpu_custom_call.1} parent=1 // pred_region
      %s36 = ssub.s32 256, 256
      %37 = vsyncadd [#allocation8], %s36
      %s39 = sshll.u32 [#allocation7], 4
      %s40 = int_to_ptr.vmem [resolvable:$true] %s39
      %42 = dma.hbm_to_vmem [thread:$0]  %s2, 256, %s40, [#allocation8]
    $region13: #{tpu_custom_call.1} parent=1 // pred_fallthru
      _
    // Predicated region
    $region14: #{tpu_custom_call.1} parent=1 // pred_check
      _
    $region15: #{tpu_custom_call.1} parent=1 // pred_check_branch
      %44 = sbr.rel (0) target = $region17
    $region16: #{tpu_custom_call.1} parent=1 // pred_region
      %45 = dma.done [#allocation5], 32
    $region17: #{tpu_custom_call.1} parent=1 // pred_fallthru
      _
    // Predicated region
    $region18: #{tpu_custom_call.1} parent=1 // pred_check
      _
    $region19: #{tpu_custom_call.1} parent=1 // pred_check_branch
      %47 = sbr.rel (0) target = $region21
    $region20: #{tpu_custom_call.1} parent=1 // pred_region
      %48 = dma.done [#allocation3], 256
    $region21: #{tpu_custom_call.1} parent=1 // pred_fallthru
      _
    // Predicated region
    $region22: #{tpu_custom_call.1} parent=1 // pred_check
      _
    $region23: #{tpu_custom_call.1} parent=1 // pred_check_branch
      %50 = sbr.rel (0) target = $region25
    $region24: #{tpu_custom_call.1} parent=1 // pred_region
      %51 = dma.done [#allocation8], 256
    $region25: #{tpu_custom_call.1} parent=1 // pred_fallthru
      _
    %52 = sfence
    %s53 = sld [smem:[#allocation2]]
    %s54 = sld [smem:[#allocation2 + $0x1]]
    %s55 = sld [smem:[#allocation2 + $0x80]]
    %s56 = sld [smem:[#allocation2 + $0x81]]
    %v57 = vld [vmem:[#allocation6] sm:$0xff]
    %v58 = vld [vmem:[#allocation6 + $0x8] sm:$0xff]
    %v59 = vld [vmem:[#allocation7] sm:$0xff]
    %v60 = vld [vmem:[#allocation7 + $0x8] sm:$0xff]
    %v61 = vstv %s53
    %v62 = vmul.f32 %v61, %v57
    %v63 = vmul.f32 %v61, %v58
    %v64 = vstv %s54
    %v65 = vmul.f32 %v64, %v59
    %v66 = vmul.f32 %v64, %v60
    %v67 = vadd.f32 %v62, %v65
    %v68 = vadd.f32 %v63, %v66
    %69 = vst [vmem:[#allocation9] sm:$0xff] %v67
    %70 = vst [vmem:[#allocation9 + $0x8] sm:$0xff] %v68
    %v71 = vstv %s55
    %v72 = vmul.f32 %v71, %v57
    %v73 = vmul.f32 %v71, %v58
    %v74 = vstv %s56
    %v75 = vmul.f32 %v74, %v59
    %v76 = vmul.f32 %v74, %v60
    %v77 = vadd.f32 %v72, %v75
    %v78 = vadd.f32 %v73, %v76
    %79 = vst [vmem:[#allocation10] sm:$0xff] %v77
    %80 = vst [vmem:[#allocation10 + $0x8] sm:$0xff] %v78
    // Predicated region
    $region26: #{tpu_custom_call.1} parent=1 // pred_check
      _
    $region27: #{tpu_custom_call.1} parent=1 // pred_check_branch
      %82 = sbr.rel (0) target = $region29
    $region28: #{tpu_custom_call.1} parent=1 // pred_region
      %s84 = ssub.s32 256, 256
      %85 = vsyncadd [#allocation4], %s84
      %s87 = sshll.u32 [#allocation9], 4
      %s88 = int_to_ptr.vmem [resolvable:$true] %s87
      %90 = dma.vmem_to_hbm [thread:$0]  %s88, 256, %s3, [#allocation4]
    $region29: #{tpu_custom_call.1} parent=1 // pred_fallthru
      _
    // Predicated region
    $region30: #{tpu_custom_call.1} parent=1 // pred_check
      _
    $region31: #{tpu_custom_call.1} parent=1 // pred_check_branch
      %92 = sbr.rel (0) target = $region33
    $region32: #{tpu_custom_call.1} parent=1 // pred_region
      %s94 = ssub.s32 256, 256
      %95 = vsyncadd [#allocation11], %s94
      %s97 = sshll.u32 [#allocation10], 4
      %s98 = int_to_ptr.vmem [resolvable:$true] %s97
      %100 = dma.vmem_to_hbm [thread:$0]  %s98, 256, %s4, [#allocation11]
    $region33: #{tpu_custom_call.1} parent=1 // pred_fallthru
      _
    // Predicated region
    $region34: #{tpu_custom_call.1} parent=1 // pred_check
      _
    $region35: #{tpu_custom_call.1} parent=1 // pred_check_branch
      %102 = sbr.rel (0) target = $region37
    $region36: #{tpu_custom_call.1} parent=1 // pred_region
      %103 = dma.done [#allocation4], 256
    $region37: #{tpu_custom_call.1} parent=1 // pred_fallthru
      _
    // Predicated region
    $region38: #{tpu_custom_call.1} parent=1 // pred_check
      _
    $region39: #{tpu_custom_call.1} parent=1 // pred_check_branch
      %105 = sbr.rel (0) target = $region41
    $region40: #{tpu_custom_call.1} parent=1 // pred_region
      %106 = dma.done [#allocation11], 256
    $region41: #{tpu_custom_call.1} parent=1 // pred_fallthru
      _
    %107 = vsyncpa [#allocation3], 1
    %108 = vsyncpa [#allocation8], 1
    %109 = vsyncpa [#allocation4], 1
    %110 = vsyncpa [#allocation11], 1
    %111 = vsyncpa [#allocation5], 1

</llo_original>
